<compile_context>
chip_gen: v7x
topology: tpu7x:2x2x1
jax: 0.10.0
libtpu: 0.0.40
codegen_flags: <defaults>
</compile_context>

<pallas_src>
import functools

import jax
import jax.numpy as jnp
import numpy as np
from jax import lax
from jax.experimental import pallas as pl
from jax.experimental.pallas import tpu as pltpu


def _duc_conv_bn_relu_kernel(x_ref, w_ref, shift_ref, o_ref, *, TH, Wp2):
    """One (batch, row-block) grid step.

    x_ref:     (Hp2*Wp2, 3*Cin) bf16  full zero-padded image of this batch item,
                                      flattened over (padded_row, padded_col); the
                                      3 horizontal taps (dx) are pre-expanded into
                                      the channel dim, ordered (dx, cin).
    w_ref:     (9*Cin, Cout_p)  bf16  BN-scale-folded weights, K ordered (dy, dx, cin).
    shift_ref: (1, Cout_p)      f32   BN shift = beta - mean * scale (zero padded).
    o_ref:     (TH*Wp2, Cout_p) f32   conv+BN+ReLU for TH output rows, all Wp2 cols
                                      (halo cols 0 and >W are dropped in the wrapper).
    """
    i = pl.program_id(1)
    rows = TH * Wp2

    # Three vertical taps (dy): 16-aligned slices along the flattened spatial dim.
    slabs = []
    for dy in range(3):
        start = pl.multiple_of((i * TH + dy) * Wp2, 16)   # Wp2 is a multiple of 16
        slabs.append(x_ref[pl.ds(start, rows), :])        # (rows, 3*Cin) bf16

    # im2col patch (rows, 9*Cin) with K ordered (dy, dx, cin) -> single MXU matmul.
    patch = jnp.concatenate(slabs, axis=-1)
    acc = jnp.dot(patch, w_ref[...], preferred_element_type=jnp.float32)

    # BN shift + ReLU in f32, lane-dense store (Cout_p is a multiple of 128).
    y = jnp.maximum(acc + shift_ref[...], 0.0)
    o_ref[...] = y.astype(o_ref.dtype)


def duc_forward(x_nchw, conv_w_oihw, gamma, beta, running_mean, running_var,
                upscale_factor=2, eps=1e-5):
    """DUC forward. x_nchw: (B, Cin, H, W) float32. Returns NCHW output (PyTorch semantics)."""
    B, Cin, H, W = x_nchw.shape
    Cout = conv_w_oihw.shape[0]
    r = upscale_factor
    assert Cout % (r * r) == 0

    # ---- tiling / padding geometry ------------------------------------------
    TH = next(d for d in (8, 4, 2, 1) if H % d == 0)      # output rows per grid step
    nH = H // TH
    Hp2 = H + 2                                           # conv-padded rows
    Wp2 = ((W + 2 + 15) // 16) * 16                       # conv-padded cols, 16-aligned (bf16 sublanes)
    Cout_p = ((Cout + 127) // 128) * 128                  # lane-dense output channels

    # ---- input prep (fused XLA pass): NCHW->NHWC, zero-pad, bf16, and
    #      pre-expand the 3 horizontal taps (dx) into the channel dim ---------
    x_nhwc = jnp.transpose(x_nchw, (0, 2, 3, 1)).astype(jnp.bfloat16)      # (B,H,W,Cin)
    x_pad = jnp.pad(x_nhwc, ((0, 0), (1, 1), (1, Wp2 - W - 1), (0, 0)))    # (B,Hp2,Wp2,Cin)
    zcol = jnp.zeros((B, Hp2, 1, Cin), jnp.bfloat16)
    x_dx0 = jnp.concatenate([zcol, x_pad[:, :, :Wp2 - 1, :]], axis=2)      # column w'-1
    x_dx2 = jnp.concatenate([x_pad[:, :, 1:, :], zcol], axis=2)            # column w'+1
    xcat = jnp.concatenate([x_dx0, x_pad, x_dx2], axis=-1)                 # (B,Hp2,Wp2,3*Cin), (dx,cin)
    x_flat = xcat.reshape(B, Hp2 * Wp2, 3 * Cin)

    # ---- weights: fold BN scale, reshape to (9*Cin, Cout), pad, bf16 --------
    scale = gamma / jnp.sqrt(running_var + eps)                            # (Cout,)
    shift = beta - running_mean * scale                                    # (Cout,)
    # OIHW -> (dy, dx, cin, cout) -> (9*Cin, Cout); K order matches the kernel patch.
    w_mat = jnp.transpose(conv_w_oihw, (2, 3, 1, 0)).reshape(9 * Cin, Cout)
    w_mat = (w_mat * scale[None, :]).astype(jnp.bfloat16)
    w_mat = jnp.pad(w_mat, ((0, 0), (0, Cout_p - Cout)))
    shift_p = jnp.pad(shift, (0, Cout_p - Cout)).reshape(1, Cout_p).astype(jnp.float32)

    # ---- Pallas hot path: fused conv3x3 + BN + ReLU --------------------------
    kernel = functools.partial(_duc_conv_bn_relu_kernel, TH=TH, Wp2=Wp2)
    out_flat = pl.pallas_call(
        kernel,
        out_shape=jax.ShapeDtypeStruct((B, H * Wp2, Cout_p), jnp.float32),
        grid_spec=pltpu.PrefetchScalarGridSpec(
            num_scalar_prefetch=0,
            grid=(B, nH),
            in_specs=[
                # Full flattened padded image of batch b; re-DMA'd only when b changes.
                pl.BlockSpec((None, Hp2 * Wp2, 3 * Cin), lambda b, i: (b, 0, 0)),
                # Weights / BN shift: resident (same block every step).
                pl.BlockSpec((9 * Cin, Cout_p), lambda b, i: (0, 0)),
                pl.BlockSpec((1, Cout_p), lambda b, i: (0, 0)),
            ],
            out_specs=pl.BlockSpec((None, TH * Wp2, Cout_p), lambda b, i: (b, i, 0)),
        ),
        compiler_params=pltpu.CompilerParams(
            dimension_semantics=("parallel", "parallel"),
            vmem_limit_bytes=48 * 1024 * 1024,
        ),
    )(x_flat, w_mat, shift_p)

    # ---- glue: drop halo cols / channel padding, PixelShuffle, return NCHW ---
    y = out_flat.reshape(B, H, Wp2, Cout_p)[:, :, 1:W + 1, :Cout]          # (B,H,W,Cout)
    Cf = Cout // (r * r)
    y = y.reshape(B, H, W, Cf, r, r)                                       # (B,H,W,C,r,r)
    y = jnp.transpose(y, (0, 3, 1, 4, 2, 5))                               # (B,C,H,r,W,r)
    return y.reshape(B, Cf, H * r, W * r)


def _reference_duc(x_nchw, conv_w_oihw, gamma, beta, running_mean, running_var,
                   upscale_factor=2, eps=1e-5):
    """Pure-JAX f32 reference (lax conv) matching the PyTorch module."""
    y = lax.conv_general_dilated(
        x_nchw, conv_w_oihw, window_strides=(1, 1), padding=((1, 1), (1, 1)),
        dimension_numbers=("NCHW", "OIHW", "NCHW"))
    scale = gamma / jnp.sqrt(running_var + eps)
    shift = beta - running_mean * scale
    y = y * scale[None, :, None, None] + shift[None, :, None, None]
    y = jnp.maximum(y, 0.0)
    B, C, H, W = y.shape
    r = upscale_factor
    Cf = C // (r * r)
    y = y.reshape(B, Cf, r, r, H, W).transpose(0, 1, 4, 2, 5, 3).reshape(B, Cf, H * r, W * r)
    return y


if __name__ == "__main__":
    # Small deterministic example: inplanes=4, planes=16, upscale_factor=2
    B, Cin, H, W = 2, 4, 16, 16
    planes, r = 16, 2

    key = jax.random.PRNGKey(0)
    k_x, k_w, k_g, k_b, k_m, k_v = jax.random.split(key, 6)

    x = jax.random.normal(k_x, (B, Cin, H, W), dtype=jnp.float32)
    conv_w = jax.random.normal(k_w, (planes, Cin, 3, 3), dtype=jnp.float32) * 0.1
    gamma = 1.0 + 0.1 * jax.random.normal(k_g, (planes,), dtype=jnp.float32)
    beta = 0.1 * jax.random.normal(k_b, (planes,), dtype=jnp.float32)
    running_mean = 0.1 * jax.random.normal(k_m, (planes,), dtype=jnp.float32)
    running_var = jnp.abs(1.0 + 0.1 * jax.random.normal(k_v, (planes,), dtype=jnp.float32))

    out = duc_forward(x, conv_w, gamma, beta, running_mean, running_var, upscale_factor=r)
    out = jax.block_until_ready(out)

    ref = _reference_duc(x, conv_w, gamma, beta, running_mean, running_var, upscale_factor=r)
    assert out.shape == (B, planes // (r * r), H * r, W * r), out.shape
    # bf16 matmul operands (f32 accumulation) vs f32 reference -> bf16-level tolerance.
    np.testing.assert_allclose(np.asarray(out), np.asarray(ref), rtol=2e-2, atol=2e-2)

    print("KERNEL_OK")
</pallas_src>

<mosaic_0001>
module attributes {stable_mosaic.version = 11 : i64} {
  func.func @_duc_conv_bn_relu_kernel(%arg0: i32, %arg1: i32, %arg2: memref<1x576x12xbf16, #tpu.memory_space<vmem>>, %arg3: memref<36x128xbf16, #tpu.memory_space<vmem>>, %arg4: memref<1x128xf32, #tpu.memory_space<vmem>>, %arg5: memref<1x256x128xf32, #tpu.memory_space<vmem>>) attributes {dimension_semantics = [#tpu.dimension_semantics<parallel>, #tpu.dimension_semantics<parallel>], iteration_bounds = array<i64: 2, 2>, scalar_prefetch = 0 : i64, scratch_operands = 0 : i64, tpu.core_type = #tpu.core_type<tc>, window_params = [{transform_indices = @transform_0, window_bounds = array<i64: 1, 576, 12>}, {pipeline_mode = #tpu.pipeline_mode<synchronous>, transform_indices = @transform_1, window_bounds = array<i64: 36, 128>}, {pipeline_mode = #tpu.pipeline_mode<synchronous>, transform_indices = @transform_2, window_bounds = array<i64: 1, 128>}, {transform_indices = @transform_3, window_bounds = array<i64: 1, 256, 128>}]} {
    %c8_i32 = arith.constant 8 : i32
    %0 = arith.muli %arg1, %c8_i32 : i32
    %c0_i32 = arith.constant 0 : i32
    %1 = arith.addi %0, %c0_i32 : i32
    %c32_i32 = arith.constant 32 : i32
    %2 = arith.muli %1, %c32_i32 : i32
    %3 = tpu.assume_multiple %2, 16 : i32
    %c0 = arith.constant 0 : index
    %4 = arith.index_cast %3 : i32 to index
    %c0_0 = arith.constant 0 : index
    %5 = vector.load %arg2[%c0, %4, %c0_0] : memref<1x576x12xbf16, #tpu.memory_space<vmem>>, vector<1x256x12xbf16>
    %6 = vector.shape_cast %5 : vector<1x256x12xbf16> to vector<256x12xbf16>
    %c8_i32_1 = arith.constant 8 : i32
    %7 = arith.muli %arg1, %c8_i32_1 : i32
    %c1_i32 = arith.constant 1 : i32
    %8 = arith.addi %7, %c1_i32 : i32
    %c32_i32_2 = arith.constant 32 : i32
    %9 = arith.muli %8, %c32_i32_2 : i32
    %10 = tpu.assume_multiple %9, 16 : i32
    %c0_3 = arith.constant 0 : index
    %11 = arith.index_cast %10 : i32 to index
    %c0_4 = arith.constant 0 : index
    %12 = vector.load %arg2[%c0_3, %11, %c0_4] : memref<1x576x12xbf16, #tpu.memory_space<vmem>>, vector<1x256x12xbf16>
    %13 = vector.shape_cast %12 : vector<1x256x12xbf16> to vector<256x12xbf16>
    %c8_i32_5 = arith.constant 8 : i32
    %14 = arith.muli %arg1, %c8_i32_5 : i32
    %c2_i32 = arith.constant 2 : i32
    %15 = arith.addi %14, %c2_i32 : i32
    %c32_i32_6 = arith.constant 32 : i32
    %16 = arith.muli %15, %c32_i32_6 : i32
    %17 = tpu.assume_multiple %16, 16 : i32
    %c0_7 = arith.constant 0 : index
    %18 = arith.index_cast %17 : i32 to index
    %c0_8 = arith.constant 0 : index
    %19 = vector.load %arg2[%c0_7, %18, %c0_8] : memref<1x576x12xbf16, #tpu.memory_space<vmem>>, vector<1x256x12xbf16>
    %20 = vector.shape_cast %19 : vector<1x256x12xbf16> to vector<256x12xbf16>
    %21 = tpu.concatenate %6, %13, %20 in 1 : vector<256x12xbf16>, vector<256x12xbf16>, vector<256x12xbf16> -> vector<256x36xbf16>
    %c0_9 = arith.constant 0 : index
    %c0_10 = arith.constant 0 : index
    %22 = vector.load %arg3[%c0_9, %c0_10] : memref<36x128xbf16, #tpu.memory_space<vmem>>, vector<36x128xbf16>
    %cst = arith.constant dense<0.000000e+00> : vector<256x128xf32>
    %23 = tpu.matmul %21, %22, %cst {dimension_numbers = #tpu.dot_dimension_numbers<[1], [0], [0], [1], [0, 0, 1, 1], [], []>} : vector<256x36xbf16>, vector<36x128xbf16>, vector<256x128xf32> -> vector<256x128xf32>
    %c0_11 = arith.constant 0 : index
    %c0_12 = arith.constant 0 : index
    %24 = vector.load %arg4[%c0_11, %c0_12] : memref<1x128xf32, #tpu.memory_space<vmem>>, vector<1x128xf32>
    %25 = vector.broadcast %24 : vector<1x128xf32> to vector<256x128xf32>
    %26 = arith.addf %23, %25 : vector<256x128xf32>
    %cst_13 = arith.constant 0.000000e+00 : f32
    %27 = vector.broadcast %cst_13 : f32 to vector<256x128xf32>
    %28 = arith.maximumf %26, %27 : vector<256x128xf32>
    %c0_14 = arith.constant 0 : index
    %c0_15 = arith.constant 0 : index
    %c0_16 = arith.constant 0 : index
    %29 = vector.load %arg5[%c0_14, %c0_15, %c0_16] : memref<1x256x128xf32, #tpu.memory_space<vmem>>, vector<1x256x128xf32>
    %30 = vector.shape_cast %29 : vector<1x256x128xf32> to vector<256x128xf32>
    %31 = vector.shape_cast %28 : vector<256x128xf32> to vector<1x256x128xf32>
    tpu.vector_store %arg5[%c0_14, %c0_15, %c0_16], %31 {strides = array<i32>} : memref<1x256x128xf32, #tpu.memory_space<vmem>>, vector<1x256x128xf32>,
    return
  }
  func.func @transform_0(%arg0: i32, %arg1: i32) -> (i32, i32, i32) {
    %c0_i32 = arith.constant 0 : i32
    %c0_i32_0 = arith.constant 0 : i32
    %c0_i32_1 = arith.constant 0 : i32
    return %arg0, %c0_i32, %c0_i32_0 : i32, i32, i32
  }
  func.func @transform_1(%arg0: i32, %arg1: i32) -> (i32, i32) {
    %c0_i32 = arith.constant 0 : i32
    %c0_i32_0 = arith.constant 0 : i32
    %c0_i32_1 = arith.constant 0 : i32
    return %c0_i32, %c0_i32_0 : i32, i32
  }
  func.func @transform_2(%arg0: i32, %arg1: i32) -> (i32, i32) {
    %c0_i32 = arith.constant 0 : i32
    %c0_i32_0 = arith.constant 0 : i32
    %c0_i32_1 = arith.constant 0 : i32
    return %c0_i32, %c0_i32_0 : i32, i32
  }
  func.func @transform_3(%arg0: i32, %arg1: i32) -> (i32, i32, i32) {
    %c0_i32 = arith.constant 0 : i32
    %c0_i32_0 = arith.constant 0 : i32
    return %arg0, %arg1, %c0_i32 : i32, i32, i32
  }
}

</mosaic_0001>

<llo_original>
// kernel: tpu_custom_call.1
$region0: #{tpu_custom_call.1}
  #allocation0 [shape = 'u32[]', space=smem, size = 0x4, offset = 0x4, fixed_abs, tag = 'smem constant byte address 0x4 - core index']
  #allocation1 [shape = 'u32[144,128]{1,0:T(1,128)}', space=vmem, size = 0x12000, scoped, tag = 'internal scratch']
  %s0 = inlined_call_operand.vmem [shape: bf16[2,576,12], index: 0, kind: input, shape index: {}]
  %s1 = inlined_call_operand.vmem [shape: bf16[36,128], index: 1, kind: input, shape index: {}]
  %s2 = inlined_call_operand.vmem [shape: f32[1,128], index: 2, kind: input, shape index: {}]
  %s3 = inlined_call_operand.hbm [shape: f32[2,512,128], index: 3, kind: output, shape index: {}]
  %s4 = sld [smem:[#allocation0]]
  $region45: #{tpu_custom_call.1} parent=0
    _
  %s6 = ssub.s32 1, %s4
  %s7 = scalar_select 0, %s6, %s4
  $region1: #{tpu_custom_call.1} parent=0
    #allocation2 [shape = 'u8[262144]{0}', space=vmem, size = 0x40000, scoped, tag = 'output window, operand 0']
    #allocation3 [shape = 's32[2]{0}', space=sflag, size = 0x8, scoped, tag = 'scoped memory for tpu_custom_call.1']
    %8 = vsyncpa [#allocation3], 0
    %s9 = scalar_lea.sflag [#allocation3], 1
    %10 = vsyncpa %s9, 0
    loop: start=0, step=1, limit=6
    $region2: #{tpu_custom_call.1} parent=1 // loop_pre_header
      _
    $region3: #{tpu_custom_call.1} parent=1 // loop_header
      %s12 = sphi 0, %s16
      %p13 = scmp.ge.s32.totalorder %s12, 6
      %s19 = sphi 0, %s31
      %s20 = sphi 0, %s27
      %s21 = sphi 0, %s19
      %s22 = sphi 0, %s20
      %s23 = sphi 0, %s21
      %s24 = sphi 0, %s22
      %s34 = sphi 0, %s36
      %s37 = sphi 0, %s34
      %s38 = sphi 0, %s37
      %s54 = sphi 0, %s38
      %s58 = sphi 0, %s58
      %s60 = sphi 0, %s58
      %s61 = sphi 0, %s60
      %s75 = sphi 0, %s61
      %s79 = sphi 0, %s79
      %s81 = sphi 0, %s79
      %s82 = sphi 0, %s81
      %s96 = sphi 0, %s82
      %s104 = sphi 0, %s106
      %s107 = sphi 0, %s104
      %s108 = sphi 0, %s107
      %s124 = sphi 0, %s108
    $region4: #{tpu_custom_call.1} parent=1 // loop_header_branch
      %15 = sbr.rel (%p13) target = $region8
    $region5: #{tpu_custom_call.1} parent=1 // loop_body
      %s17 = ssub.s32 %s12, 1
      %s18 = ssub.s32 %s12, 2
      %s25 = sadd.s32 1, %s20
      %p26 = scmp.ge.s32.totalorder %s25, 2
      %s27 = scalar_select %p26, 0, %s25
      %s28 = sadd.s32 1, %s19
      %s29 = scalar_select %p26, %s28, %s19
      %p30 = scmp.ge.s32.totalorder %s29, 2
      %s31 = scalar_select %p30, 0, %s29
      %s32 = ssub.s32 %s19, %s31
      %p33 = scmp.eq.s32.totalorder %s32, 0
      %s35 = sadd.s32 %s34, 1
      %s36 = scalar_select %p33, %s34, %s35
      %p39 = pneg %p33
      %p40 = scmp.eq.s32.totalorder %s12, 3
      %p41 = por %p39, %p40
      %p42 = scmp.ne.s32.totalorder %s34, %s37
      %p43 = scmp.eq.s32.totalorder %s12, 0
      %p44 = por %p42, %p43
      %p45 = scmp.ne.s32.totalorder %s34, %s37
      %p46 = scmp.eq.s32.totalorder %s17, 3
      %p47 = por %p45, %p46
      %p48 = scmp.ne.s32.totalorder %s37, %s38
      %p49 = scmp.eq.s32.totalorder %s17, 0
      %p50 = por %p48, %p49
      %p51 = scmp.ne.s32.totalorder %s37, %s38
      %p52 = scmp.eq.s32.totalorder %s18, 3
      %p53 = por %p51, %p52
      %p55 = scmp.ne.s32.totalorder %s38, %s54
      %p56 = scmp.eq.s32.totalorder %s18, 0
      %p57 = por %p55, %p56
      %s59 = sadd.s32 %s58, 1
      %p62 = scmp.eq.s32.totalorder %s12, 3
      %p63 = scmp.ne.s32.totalorder %s58, %s60
      %p64 = scmp.eq.s32.totalorder %s12, 0
      %p65 = por %p63, %p64
      %p66 = scmp.ne.s32.totalorder %s58, %s60
      %p67 = scmp.eq.s32.totalorder %s17, 3
      %p68 = por %p66, %p67
      %p69 = scmp.ne.s32.totalorder %s60, %s61
      %p70 = scmp.eq.s32.totalorder %s17, 0
      %p71 = por %p69, %p70
      %p72 = scmp.ne.s32.totalorder %s60, %s61
      %p73 = scmp.eq.s32.totalorder %s18, 3
      %p74 = por %p72, %p73
      %p76 = scmp.ne.s32.totalorder %s61, %s75
      %p77 = scmp.eq.s32.totalorder %s18, 0
      %p78 = por %p76, %p77
      %s80 = sadd.s32 %s79, 1
      %p83 = scmp.eq.s32.totalorder %s12, 3
      %p84 = scmp.ne.s32.totalorder %s79, %s81
      %p85 = scmp.eq.s32.totalorder %s12, 0
      %p86 = por %p84, %p85
      %p87 = scmp.ne.s32.totalorder %s79, %s81
      %p88 = scmp.eq.s32.totalorder %s17, 3
      %p89 = por %p87, %p88
      %p90 = scmp.ne.s32.totalorder %s81, %s82
      %p91 = scmp.eq.s32.totalorder %s17, 0
      %p92 = por %p90, %p91
      %p93 = scmp.ne.s32.totalorder %s81, %s82
      %p94 = scmp.eq.s32.totalorder %s18, 3
      %p95 = por %p93, %p94
      %p97 = scmp.ne.s32.totalorder %s82, %s96
      %p98 = scmp.eq.s32.totalorder %s18, 0
      %p99 = por %p97, %p98
      %s100 = ssub.s32 %s19, %s31
      %s101 = ssub.s32 %s20, %s27
      %s102 = sor.u32 %s100, %s101
      %p103 = scmp.eq.s32.totalorder %s102, 0
      %s105 = sadd.s32 %s104, 1
      %s106 = scalar_select %p103, %s104, %s105
      %p109 = pneg %p103
      %p110 = scmp.eq.s32.totalorder %s12, 3
      %p111 = por %p109, %p110
      %p112 = scmp.ne.s32.totalorder %s104, %s107
      %p113 = scmp.eq.s32.totalorder %s12, 0
      %p114 = por %p112, %p113
      %p115 = scmp.ne.s32.totalorder %s104, %s107
      %p116 = scmp.eq.s32.totalorder %s17, 3
      %p117 = por %p115, %p116
      %p118 = scmp.ne.s32.totalorder %s107, %s108
      %p119 = scmp.eq.s32.totalorder %s17, 0
      %p120 = por %p118, %p119
      %p121 = scmp.ne.s32.totalorder %s107, %s108
      %p122 = scmp.eq.s32.totalorder %s18, 3
      %p123 = por %p121, %p122
      %p125 = scmp.ne.s32.totalorder %s108, %s124
      %p126 = scmp.eq.s32.totalorder %s18, 0
      %p127 = por %p125, %p126
      %p128 = scmp.le.s32.totalorder 1, %s12
      %p129 = scmp.lt.s32.totalorder %s12, 5
      %p130 = pnand %p128, %p129
      %p131 = pneg %p130
      // Predicated region
      $region9: #{tpu_custom_call.1} parent=5 // pred_check
        _
      $region10: #{tpu_custom_call.1} parent=5 // pred_check_branch
        %133 = sbr.rel (%p130) target = $region12
      $region11: #{tpu_custom_call.1} parent=5 // pred_region
        %s134 = ssub.s32 %s12, 1
        // Predicated region
        $region13: #{tpu_custom_call.1} parent=11 // pred_check
          %p135 = pneg %p71
        $region14: #{tpu_custom_call.1} parent=11 // pred_check_branch
          %137 = sbr.rel (%p135) target = $region16
        $region15: #{tpu_custom_call.1} parent=11 // pred_region
          _
        $region16: #{tpu_custom_call.1} parent=11 // pred_fallthru
          _
        // Predicated region
        $region17: #{tpu_custom_call.1} parent=11 // pred_check
          %p138 = pneg %p92
        $region18: #{tpu_custom_call.1} parent=11 // pred_check_branch
          %140 = sbr.rel (%p138) target = $region20
        $region19: #{tpu_custom_call.1} parent=11 // pred_region
          _
        $region20: #{tpu_custom_call.1} parent=11 // pred_fallthru
          _
      $region12: #{tpu_custom_call.1} parent=5 // pred_fallthru
        _
      %p141 = scmp.lt.s32.totalorder %s12, 4
      // Predicated region
      $region21: #{tpu_custom_call.1} parent=5 // pred_check
        %p142 = pneg %p141
      $region22: #{tpu_custom_call.1} parent=5 // pred_check_branch
        %144 = sbr.rel (%p142) target = $region24
      $region23: #{tpu_custom_call.1} parent=5 // pred_region
        // Predicated region
        $region25: #{tpu_custom_call.1} parent=23 // pred_check
          %p145 = pneg %p44
        $region26: #{tpu_custom_call.1} parent=23 // pred_check_branch
          %147 = sbr.rel (%p145) target = $region28
        $region27: #{tpu_custom_call.1} parent=23 // pred_region
          %p148 = scmp.lt.s32.totalorder %s19, 1
          %s149 = scalar_select %p148, %s19, 1
          %s150 = smul.addr %s149, 72
          %s151 = smul.addr %s150, 4
          %s152 = scalar_lea.vmem %s0, %s151
        $region28: #{tpu_custom_call.1} parent=23 // pred_fallthru
          _
      $region24: #{tpu_custom_call.1} parent=5 // pred_fallthru
        _
      %p153 = scmp.le.s32.totalorder 1, %s12
      %p154 = scmp.lt.s32.totalorder %s12, 5
      %p155 = pnand %p153, %p154
      %p156 = pneg %p155
      // Predicated region
      $region29: #{tpu_custom_call.1} parent=5 // pred_check
        _
      $region30: #{tpu_custom_call.1} parent=5 // pred_check_branch
        %158 = sbr.rel (%p155) target = $region32
      $region31: #{tpu_custom_call.1} parent=5 // pred_region
        %s159 = ssub.s32 %s12, 1
        %p160 = scmp.lt.s32.totalorder %s21, 1
        %s161 = scalar_select %p160, %s21, 1
        %s162 = smul.addr %s161, 72
        %s163 = smul.addr %s162, 4
        %s164 = scalar_lea.vmem %s0, %s163
        %p165 = pneg %p50
        %p166 = pneg %p47
        %p167 = pneg %p71
        %p168 = pneg %p68
        %p169 = pneg %p92
        %p170 = pneg %p89
        %p171 = pneg %p120
        %p172 = pneg %p117
        %s173 = sand.u32 %s107, 1
        %s174 = scalar_lea.sflag [#allocation3], %s173
        %s175 = sand.u32 %s107, 1
        %s176 = smul.addr %s175, 256
        %s177 = scalar_lea.vmem [#allocation2], %s176
        %p178 = scmp.lt.s32.totalorder %s21, 1
        %s179 = scalar_select %p178, %s21, 1
        %s180 = smul.addr %s179, 72
        %s181 = smul.addr %s180, 4
        %s182 = scalar_lea.vmem %s0, %s181
        %s183 = smul.u32 32, %s22
        %s185 = smul.u32 %s22, 256
        %s186 = sshra.s32 %s185, 3
        %s187 = sand.u32 %s185, 7
        %s188 = smul.addr %s186, 4
        %s189 = scalar_lea.vmem %s182, %s188
        %v190 = vld [vmem:[%s189] sm:$0xf]
        %v191 = vld [vmem:[%s189 + $0x4] sm:$0xf]
        %v192 = vld [vmem:[%s189 + $0x8] sm:$0xf]
        %v193 = vld [vmem:[%s189 + $0xc] sm:$0xf]
        %v194 = vld [vmem:[%s189 + $0x10] sm:$0xf]
        %v195 = vld [vmem:[%s189 + $0x14] sm:$0xf]
        %v196 = vld [vmem:[%s189 + $0x18] sm:$0xf]
        %v197 = vld [vmem:[%s189 + $0x1c] sm:$0xf]
        %v198 = vld [vmem:[%s189 + $0x20] sm:$0xf]
        %v199 = vld [vmem:[%s189 + $0x24] sm:$0xf]
        %v200 = vld [vmem:[%s189 + $0x28] sm:$0xf]
        %v201 = vld [vmem:[%s189 + $0x2c] sm:$0xf]
        %v202 = vld [vmem:[%s189 + $0x30] sm:$0xf]
        %v203 = vld [vmem:[%s189 + $0x34] sm:$0xf]
        %v204 = vld [vmem:[%s189 + $0x38] sm:$0xf]
        %v205 = vld [vmem:[%s189 + $0x3c] sm:$0xf]
        %v206 = vld [vmem:[%s189 + $0x40] sm:$0xf]
        %v207 = vld [vmem:[%s189 + $0x44] sm:$0xf]
        %v208 = vld [vmem:[%s189 + $0x48] sm:$0xf]
        %v209 = vld [vmem:[%s189 + $0x4c] sm:$0xf]
        %v210 = vld [vmem:[%s189 + $0x50] sm:$0xf]
        %v211 = vld [vmem:[%s189 + $0x54] sm:$0xf]
        %v212 = vld [vmem:[%s189 + $0x58] sm:$0xf]
        %v213 = vld [vmem:[%s189 + $0x5c] sm:$0xf]
        %v214 = vld [vmem:[%s189 + $0x60] sm:$0xf]
        %v215 = vld [vmem:[%s189 + $0x64] sm:$0xf]
        %v216 = vld [vmem:[%s189 + $0x68] sm:$0xf]
        %v217 = vld [vmem:[%s189 + $0x6c] sm:$0xf]
        %v218 = vld [vmem:[%s189 + $0x70] sm:$0xf]
        %v219 = vld [vmem:[%s189 + $0x74] sm:$0xf]
        %v220 = vld [vmem:[%s189 + $0x78] sm:$0xf]
        %v221 = vld [vmem:[%s189 + $0x7c] sm:$0xf]
        %s222 = smul.u32 %s22, 8
        %s223 = sadd.s32 %s222, 1
        %s224 = smul.u32 %s223, 32
        %s225 = sshra.s32 %s224, 3
        %s226 = sand.u32 %s224, 7
        %s227 = smul.addr %s225, 4
        %s228 = scalar_lea.vmem %s182, %s227
        %v229 = vld [vmem:[%s228] sm:$0xf]
        %v230 = vld [vmem:[%s228 + $0x4] sm:$0xf]
        %v231 = vld [vmem:[%s228 + $0x8] sm:$0xf]
        %v232 = vld [vmem:[%s228 + $0xc] sm:$0xf]
        %v233 = vld [vmem:[%s228 + $0x10] sm:$0xf]
        %v234 = vld [vmem:[%s228 + $0x14] sm:$0xf]
        %v235 = vld [vmem:[%s228 + $0x18] sm:$0xf]
        %v236 = vld [vmem:[%s228 + $0x1c] sm:$0xf]
        %v237 = vld [vmem:[%s228 + $0x20] sm:$0xf]
        %v238 = vld [vmem:[%s228 + $0x24] sm:$0xf]
        %v239 = vld [vmem:[%s228 + $0x28] sm:$0xf]
        %v240 = vld [vmem:[%s228 + $0x2c] sm:$0xf]
        %v241 = vld [vmem:[%s228 + $0x30] sm:$0xf]
        %v242 = vld [vmem:[%s228 + $0x34] sm:$0xf]
        %v243 = vld [vmem:[%s228 + $0x38] sm:$0xf]
        %v244 = vld [vmem:[%s228 + $0x3c] sm:$0xf]
        %v245 = vld [vmem:[%s228 + $0x40] sm:$0xf]
        %v246 = vld [vmem:[%s228 + $0x44] sm:$0xf]
        %v247 = vld [vmem:[%s228 + $0x48] sm:$0xf]
        %v248 = vld [vmem:[%s228 + $0x4c] sm:$0xf]
        %v249 = vld [vmem:[%s228 + $0x50] sm:$0xf]
        %v250 = vld [vmem:[%s228 + $0x54] sm:$0xf]
        %v251 = vld [vmem:[%s228 + $0x58] sm:$0xf]
        %v252 = vld [vmem:[%s228 + $0x5c] sm:$0xf]
        %v253 = vld [vmem:[%s228 + $0x60] sm:$0xf]
        %v254 = vld [vmem:[%s228 + $0x64] sm:$0xf]
        %v255 = vld [vmem:[%s228 + $0x68] sm:$0xf]
        %v256 = vld [vmem:[%s228 + $0x6c] sm:$0xf]
        %v257 = vld [vmem:[%s228 + $0x70] sm:$0xf]
        %v258 = vld [vmem:[%s228 + $0x74] sm:$0xf]
        %v259 = vld [vmem:[%s228 + $0x78] sm:$0xf]
        %v260 = vld [vmem:[%s228 + $0x7c] sm:$0xf]
        %s261 = sadd.s32 %s222, 2
        %s262 = smul.u32 %s261, 32
        %s263 = sshra.s32 %s262, 3
        %s264 = sand.u32 %s262, 7
        %s265 = smul.addr %s263, 4
        %s266 = scalar_lea.vmem %s182, %s265
        %v267 = vld [vmem:[%s266] sm:$0xf]
        %v268 = vld [vmem:[%s266 + $0x4] sm:$0xf]
        %v269 = vld [vmem:[%s266 + $0x8] sm:$0xf]
        %v270 = vld [vmem:[%s266 + $0xc] sm:$0xf]
        %v271 = vld [vmem:[%s266 + $0x10] sm:$0xf]
        %v272 = vld [vmem:[%s266 + $0x14] sm:$0xf]
        %v273 = vld [vmem:[%s266 + $0x18] sm:$0xf]
        %v274 = vld [vmem:[%s266 + $0x1c] sm:$0xf]
        %v275 = vld [vmem:[%s266 + $0x20] sm:$0xf]
        %v276 = vld [vmem:[%s266 + $0x24] sm:$0xf]
        %v277 = vld [vmem:[%s266 + $0x28] sm:$0xf]
        %v278 = vld [vmem:[%s266 + $0x2c] sm:$0xf]
        %v279 = vld [vmem:[%s266 + $0x30] sm:$0xf]
        %v280 = vld [vmem:[%s266 + $0x34] sm:$0xf]
        %v281 = vld [vmem:[%s266 + $0x38] sm:$0xf]
        %v282 = vld [vmem:[%s266 + $0x3c] sm:$0xf]
        %v283 = vld [vmem:[%s266 + $0x40] sm:$0xf]
        %v284 = vld [vmem:[%s266 + $0x44] sm:$0xf]
        %v285 = vld [vmem:[%s266 + $0x48] sm:$0xf]
        %v286 = vld [vmem:[%s266 + $0x4c] sm:$0xf]
        %v287 = vld [vmem:[%s266 + $0x50] sm:$0xf]
        %v288 = vld [vmem:[%s266 + $0x54] sm:$0xf]
        %v289 = vld [vmem:[%s266 + $0x58] sm:$0xf]
        %v290 = vld [vmem:[%s266 + $0x5c] sm:$0xf]
        %v291 = vld [vmem:[%s266 + $0x60] sm:$0xf]
        %v292 = vld [vmem:[%s266 + $0x64] sm:$0xf]
        %v293 = vld [vmem:[%s266 + $0x68] sm:$0xf]
        %v294 = vld [vmem:[%s266 + $0x6c] sm:$0xf]
        %v295 = vld [vmem:[%s266 + $0x70] sm:$0xf]
        %v296 = vld [vmem:[%s266 + $0x74] sm:$0xf]
        %v297 = vld [vmem:[%s266 + $0x78] sm:$0xf]
        %v298 = vld [vmem:[%s266 + $0x7c] sm:$0xf]
        %v331 = vunpack.c.l.b16 %v190
        %v332 = vunpack.c.l.b16 %v191
        %v333 = vunpack.c.l.b16 %v192
        %v334 = vunpack.c.l.b16 %v193
        %v335 = vunpack.c.l.b16 %v194
        %v336 = vunpack.c.l.b16 %v195
        %v337 = vunpack.c.l.b16 %v196
        %v338 = vunpack.c.l.b16 %v197
        %v339 = vunpack.c.l.b16 %v198
        %v340 = vunpack.c.l.b16 %v199
        %v341 = vunpack.c.l.b16 %v200
        %v342 = vunpack.c.l.b16 %v201
        %v343 = vunpack.c.l.b16 %v202
        %v344 = vunpack.c.l.b16 %v203
        %v345 = vunpack.c.l.b16 %v204
        %v346 = vunpack.c.l.b16 %v205
        %v347 = vunpack.c.l.b16 %v206
        %v348 = vunpack.c.l.b16 %v207
        %v349 = vunpack.c.l.b16 %v208
        %v350 = vunpack.c.l.b16 %v209
        %v351 = vunpack.c.l.b16 %v210
        %v352 = vunpack.c.l.b16 %v211
        %v353 = vunpack.c.l.b16 %v212
        %v354 = vunpack.c.l.b16 %v213
        %v355 = vunpack.c.l.b16 %v214
        %v356 = vunpack.c.l.b16 %v215
        %v357 = vunpack.c.l.b16 %v216
        %v358 = vunpack.c.l.b16 %v217
        %v359 = vunpack.c.l.b16 %v218
        %v360 = vunpack.c.l.b16 %v219
        %v361 = vunpack.c.l.b16 %v220
        %v362 = vunpack.c.l.b16 %v221
        %v363 = vpack.c.b16 %v332, %v331
        %v364 = vpack.c.b16 %v334, %v333
        %v365 = vpack.c.b16 %v336, %v335
        %v366 = vpack.c.b16 %v338, %v337
        %v367 = vpack.c.b16 %v340, %v339
        %v368 = vpack.c.b16 %v342, %v341
        %v369 = vpack.c.b16 %v344, %v343
        %v370 = vpack.c.b16 %v346, %v345
        %v371 = vpack.c.b16 %v348, %v347
        %v372 = vpack.c.b16 %v350, %v349
        %v373 = vpack.c.b16 %v352, %v351
        %v374 = vpack.c.b16 %v354, %v353
        %v375 = vpack.c.b16 %v356, %v355
        %v376 = vpack.c.b16 %v358, %v357
        %v377 = vpack.c.b16 %v360, %v359
        %v378 = vpack.c.b16 %v362, %v361
        %v411 = vunpack.c.l.b16 %v229
        %v412 = vunpack.c.l.b16 %v230
        %v413 = vunpack.c.l.b16 %v231
        %v414 = vunpack.c.l.b16 %v232
        %v415 = vunpack.c.l.b16 %v233
        %v416 = vunpack.c.l.b16 %v234
        %v417 = vunpack.c.l.b16 %v235
        %v418 = vunpack.c.l.b16 %v236
        %v419 = vunpack.c.l.b16 %v237
        %v420 = vunpack.c.l.b16 %v238
        %v421 = vunpack.c.l.b16 %v239
        %v422 = vunpack.c.l.b16 %v240
        %v423 = vunpack.c.l.b16 %v241
        %v424 = vunpack.c.l.b16 %v242
        %v425 = vunpack.c.l.b16 %v243
        %v426 = vunpack.c.l.b16 %v244
        %v427 = vunpack.c.l.b16 %v245
        %v428 = vunpack.c.l.b16 %v246
        %v429 = vunpack.c.l.b16 %v247
        %v430 = vunpack.c.l.b16 %v248
        %v431 = vunpack.c.l.b16 %v249
        %v432 = vunpack.c.l.b16 %v250
        %v433 = vunpack.c.l.b16 %v251
        %v434 = vunpack.c.l.b16 %v252
        %v435 = vunpack.c.l.b16 %v253
        %v436 = vunpack.c.l.b16 %v254
        %v437 = vunpack.c.l.b16 %v255
        %v438 = vunpack.c.l.b16 %v256
        %v439 = vunpack.c.l.b16 %v257
        %v440 = vunpack.c.l.b16 %v258
        %v441 = vunpack.c.l.b16 %v259
        %v442 = vunpack.c.l.b16 %v260
        %v443 = vpack.c.b16 %v412, %v411
        %v444 = vpack.c.b16 %v414, %v413
        %v445 = vpack.c.b16 %v416, %v415
        %v446 = vpack.c.b16 %v418, %v417
        %v447 = vpack.c.b16 %v420, %v419
        %v448 = vpack.c.b16 %v422, %v421
        %v449 = vpack.c.b16 %v424, %v423
        %v450 = vpack.c.b16 %v426, %v425
        %v451 = vpack.c.b16 %v428, %v427
        %v452 = vpack.c.b16 %v430, %v429
        %v453 = vpack.c.b16 %v432, %v431
        %v454 = vpack.c.b16 %v434, %v433
        %v455 = vpack.c.b16 %v436, %v435
        %v456 = vpack.c.b16 %v438, %v437
        %v457 = vpack.c.b16 %v440, %v439
        %v458 = vpack.c.b16 %v442, %v441
        %459 = vrot.lane.b32.xlu0 %v443, 12
        %v460 = vpop.permute.xlu0 %459
        %461 = vrot.lane.b32.xlu0 %v444, 12
        %v462 = vpop.permute.xlu0 %461
        %463 = vrot.lane.b32.xlu0 %v445, 12
        %v464 = vpop.permute.xlu0 %463
        %465 = vrot.lane.b32.xlu0 %v446, 12
        %v466 = vpop.permute.xlu0 %465
        %467 = vrot.lane.b32.xlu0 %v447, 12
        %v468 = vpop.permute.xlu0 %467
        %469 = vrot.lane.b32.xlu0 %v448, 12
        %v470 = vpop.permute.xlu0 %469
        %471 = vrot.lane.b32.xlu0 %v449, 12
        %v472 = vpop.permute.xlu0 %471
        %473 = vrot.lane.b32.xlu0 %v450, 12
        %v474 = vpop.permute.xlu0 %473
        %475 = vrot.lane.b32.xlu0 %v451, 12
        %v476 = vpop.permute.xlu0 %475
        %477 = vrot.lane.b32.xlu0 %v452, 12
        %v478 = vpop.permute.xlu0 %477
        %479 = vrot.lane.b32.xlu0 %v453, 12
        %v480 = vpop.permute.xlu0 %479
        %481 = vrot.lane.b32.xlu0 %v454, 12
        %v482 = vpop.permute.xlu0 %481
        %483 = vrot.lane.b32.xlu0 %v455, 12
        %v484 = vpop.permute.xlu0 %483
        %485 = vrot.lane.b32.xlu0 %v456, 12
        %v486 = vpop.permute.xlu0 %485
        %487 = vrot.lane.b32.xlu0 %v457, 12
        %v488 = vpop.permute.xlu0 %487
        %489 = vrot.lane.b32.xlu0 %v458, 12
        %v490 = vpop.permute.xlu0 %489
        %v523 = vunpack.c.l.b16 %v267
        %v524 = vunpack.c.l.b16 %v268
        %v525 = vunpack.c.l.b16 %v269
        %v526 = vunpack.c.l.b16 %v270
        %v527 = vunpack.c.l.b16 %v271
        %v528 = vunpack.c.l.b16 %v272
        %v529 = vunpack.c.l.b16 %v273
        %v530 = vunpack.c.l.b16 %v274
        %v531 = vunpack.c.l.b16 %v275
        %v532 = vunpack.c.l.b16 %v276
        %v533 = vunpack.c.l.b16 %v277
        %v534 = vunpack.c.l.b16 %v278
        %v535 = vunpack.c.l.b16 %v279
        %v536 = vunpack.c.l.b16 %v280
        %v537 = vunpack.c.l.b16 %v281
        %v538 = vunpack.c.l.b16 %v282
        %v539 = vunpack.c.l.b16 %v283
        %v540 = vunpack.c.l.b16 %v284
        %v541 = vunpack.c.l.b16 %v285
        %v542 = vunpack.c.l.b16 %v286
        %v543 = vunpack.c.l.b16 %v287
        %v544 = vunpack.c.l.b16 %v288
        %v545 = vunpack.c.l.b16 %v289
        %v546 = vunpack.c.l.b16 %v290
        %v547 = vunpack.c.l.b16 %v291
        %v548 = vunpack.c.l.b16 %v292
        %v549 = vunpack.c.l.b16 %v293
        %v550 = vunpack.c.l.b16 %v294
        %v551 = vunpack.c.l.b16 %v295
        %v552 = vunpack.c.l.b16 %v296
        %v553 = vunpack.c.l.b16 %v297
        %v554 = vunpack.c.l.b16 %v298
        %v555 = vpack.c.b16 %v524, %v523
        %v556 = vpack.c.b16 %v526, %v525
        %v557 = vpack.c.b16 %v528, %v527
        %v558 = vpack.c.b16 %v530, %v529
        %v559 = vpack.c.b16 %v532, %v531
        %v560 = vpack.c.b16 %v534, %v533
        %v561 = vpack.c.b16 %v536, %v535
        %v562 = vpack.c.b16 %v538, %v537
        %v563 = vpack.c.b16 %v540, %v539
        %v564 = vpack.c.b16 %v542, %v541
        %v565 = vpack.c.b16 %v544, %v543
        %v566 = vpack.c.b16 %v546, %v545
        %v567 = vpack.c.b16 %v548, %v547
        %v568 = vpack.c.b16 %v550, %v549
        %v569 = vpack.c.b16 %v552, %v551
        %v570 = vpack.c.b16 %v554, %v553
        %571 = vrot.lane.b32.xlu0 %v555, 24
        %v572 = vpop.permute.xlu0 %571
        %573 = vrot.lane.b32.xlu0 %v556, 24
        %v574 = vpop.permute.xlu0 %573
        %575 = vrot.lane.b32.xlu0 %v557, 24
        %v576 = vpop.permute.xlu0 %575
        %577 = vrot.lane.b32.xlu0 %v558, 24
        %v578 = vpop.permute.xlu0 %577
        %579 = vrot.lane.b32.xlu0 %v559, 24
        %v580 = vpop.permute.xlu0 %579
        %581 = vrot.lane.b32.xlu0 %v560, 24
        %v582 = vpop.permute.xlu0 %581
        %583 = vrot.lane.b32.xlu0 %v561, 24
        %v584 = vpop.permute.xlu0 %583
        %585 = vrot.lane.b32.xlu0 %v562, 24
        %v586 = vpop.permute.xlu0 %585
        %587 = vrot.lane.b32.xlu0 %v563, 24
        %v588 = vpop.permute.xlu0 %587
        %589 = vrot.lane.b32.xlu0 %v564, 24
        %v590 = vpop.permute.xlu0 %589
        %591 = vrot.lane.b32.xlu0 %v565, 24
        %v592 = vpop.permute.xlu0 %591
        %593 = vrot.lane.b32.xlu0 %v566, 24
        %v594 = vpop.permute.xlu0 %593
        %595 = vrot.lane.b32.xlu0 %v567, 24
        %v596 = vpop.permute.xlu0 %595
        %597 = vrot.lane.b32.xlu0 %v568, 24
        %v598 = vpop.permute.xlu0 %597
        %599 = vrot.lane.b32.xlu0 %v569, 24
        %v600 = vpop.permute.xlu0 %599
        %601 = vrot.lane.b32.xlu0 %v570, 24
        %v602 = vpop.permute.xlu0 %601
        %vm603 = vcmask 97280
        %v606 = vsel %vm603, %v363, %v460
        %v609 = vsel %vm603, %v364, %v462
        %v612 = vsel %vm603, %v365, %v464
        %v615 = vsel %vm603, %v366, %v466
        %v618 = vsel %vm603, %v367, %v468
        %v621 = vsel %vm603, %v368, %v470
        %v624 = vsel %vm603, %v369, %v472
        %v627 = vsel %vm603, %v370, %v474
        %v630 = vsel %vm603, %v371, %v476
        %v633 = vsel %vm603, %v372, %v478
        %v636 = vsel %vm603, %v373, %v480
        %v639 = vsel %vm603, %v374, %v482
        %v642 = vsel %vm603, %v375, %v484
        %v645 = vsel %vm603, %v376, %v486
        %v648 = vsel %vm603, %v377, %v488
        %v651 = vsel %vm603, %v378, %v490
        %vm652 = vcmask 195584
        %v654 = vsel %vm652, %v606, %v572
        %v656 = vsel %vm652, %v609, %v574
        %v658 = vsel %vm652, %v612, %v576
        %v660 = vsel %vm652, %v615, %v578
        %v662 = vsel %vm652, %v618, %v580
        %v664 = vsel %vm652, %v621, %v582
        %v666 = vsel %vm652, %v624, %v584
        %v668 = vsel %vm652, %v627, %v586
        %v670 = vsel %vm652, %v630, %v588
        %v672 = vsel %vm652, %v633, %v590
        %v674 = vsel %vm652, %v636, %v592
        %v676 = vsel %vm652, %v639, %v594
        %v678 = vsel %vm652, %v642, %v596
        %v680 = vsel %vm652, %v645, %v598
        %v682 = vsel %vm652, %v648, %v600
        %v684 = vsel %vm652, %v651, %v602
        %v685 = vld [vmem:[%s1] sm:$0xf]
        %v686 = vld [vmem:[%s1 + $0x4] sm:$0xf]
        %v687 = vld [vmem:[%s1 + $0x8] sm:$0xf]
        %v688 = vld [vmem:[%s1 + $0xc] sm:$0xf]
        %v689 = vld [vmem:[%s1 + $0x10] sm:$0x3]
        %v690 = vld [vmem:[%s2] sm:$0x1]
        %v692 = vlaneseq
        %v693 = vshrl.u32 %v692, 7
        %v694 = vsub.s32 0, %v693
        %v695 = vrot.slane %v690, %v694
        %v702 = vunpack.c.l.b16 %v685
        %v703 = vunpack.c.l.b16 %v686
        %v704 = vunpack.c.l.b16 %v687
        %v705 = vunpack.c.l.b16 %v688
        %v706 = vunpack.c.l.b16 %v689
        %v707 = vpack.c.b16 %v703, %v702
        %v708 = vpack.c.b16 %v705, %v704
        %v709 = vpack.c.b16 %v706, %v706
        %vm712 = vcmask 293888
        %v713 = vsel %vm712, %v654, 0
        %v715 = vsel %vm712, %v656, 0
        %v717 = vsel %vm712, %v658, 0
        %v719 = vsel %vm712, %v660, 0
        %v721 = vsel %vm712, %v662, 0
        %v723 = vsel %vm712, %v664, 0
        %v725 = vsel %vm712, %v666, 0
        %v727 = vsel %vm712, %v668, 0
        %v729 = vsel %vm712, %v670, 0
        %v731 = vsel %vm712, %v672, 0
        %v733 = vsel %vm712, %v674, 0
        %v735 = vsel %vm712, %v676, 0
        %v737 = vsel %vm712, %v678, 0
        %v739 = vsel %vm712, %v680, 0
        %v741 = vsel %vm712, %v682, 0
        %v743 = vsel %vm712, %v684, 0
        %vm745 = vcmask 1041408
        %v747 = vsel %vm745, %v709, 0
        %749 = vmatprep.subr.bf16.mxu0 0
        %750 = vmatpush1.bf16.msra.mxu0 %v707
        %751 = vmatprep.subr.bf16.mxu0 0
        %752 = vmatpush1.bf16.msra.mxu0 %v708
        %753 = vmatprep.subr.bf16.mxu0 0
        %754 = vmatpush1.bf16.msra.mxu0 %v747
        %755 = vmatprep.subr.bf16.mxu0 0
        %756 = vmatpush1.bf16.msra.mxu0 0
        %757 = vmatprep.subr.bf16.mxu0 0
        %758 = vmatpush1.bf16.msra.mxu0 0
        %759 = vmatprep.subr.bf16.mxu0 0
        %760 = vmatpush1.bf16.msra.mxu0 0
        %761 = vmatprep.subr.bf16.mxu0 0
        %762 = vmatpush1.bf16.msra.mxu0 0
        %763 = vmatprep.subr.bf16.mxu0 0
        %764 = vmatpush1.bf16.msra.mxu0 0
        %765 = vmatprep.subr.bf16.mxu0 0
        %766 = vmatpush1.bf16.msra.mxu0 0
        %767 = vmatprep.subr.bf16.mxu0 0
        %768 = vmatpush1.bf16.msra.mxu0 0
        %769 = vmatprep.subr.bf16.mxu0 0
        %770 = vmatpush1.bf16.msra.mxu0 0
        %771 = vmatprep.subr.bf16.mxu0 0
        %772 = vmatpush1.bf16.msra.mxu0 0
        %773 = vmatprep.subr.bf16.mxu0 0
        %774 = vmatpush1.bf16.msra.mxu0 0
        %775 = vmatprep.subr.bf16.mxu0 0
        %776 = vmatpush1.bf16.msra.mxu0 0
        %777 = vmatprep.subr.bf16.mxu0 0
        %778 = vmatpush1.bf16.msra.mxu0 0
        %779 = vmatprep.subr.bf16.mxu0 0
        %780 = vmatpush1.bf16.msra.mxu0 0
        %781 = vmatprep.mubr.bf16.mxu0 0
        %782 = vmatmul.mubr.bf16.gmra.mrb[0].mxu0 %v713
        %v783 = vpop.f32.mrb[0].mxu0
        %v784 = vadd.f32 %v695, %v783
        %v785 = vpop.f32.mrb[0].mxu0
        %v786 = vpop.f32.mrb[0].mxu0
        %v787 = vadd.f32 %v695, %v786
        %v788 = vpop.f32.mrb[0].mxu0
        %789 = vmatprep.mubr.bf16.mxu0 0
        %790 = vmatmul.mubr.bf16.gmra.mrb[0].mxu0 %v715
        %v791 = vpop.f32.mrb[0].mxu0
        %v792 = vadd.f32 %v695, %v791
        %v793 = vpop.f32.mrb[0].mxu0
        %v794 = vpop.f32.mrb[0].mxu0
        %v795 = vadd.f32 %v695, %v794
        %v796 = vpop.f32.mrb[0].mxu0
        %797 = vmatprep.mubr.bf16.mxu0 0
        %798 = vmatmul.mubr.bf16.gmra.mrb[0].mxu0 %v717
        %v799 = vpop.f32.mrb[0].mxu0
        %v800 = vadd.f32 %v695, %v799
        %v801 = vpop.f32.mrb[0].mxu0
        %v802 = vpop.f32.mrb[0].mxu0
        %v803 = vadd.f32 %v695, %v802
        %v804 = vpop.f32.mrb[0].mxu0
        %805 = vmatprep.mubr.bf16.mxu0 0
        %806 = vmatmul.mubr.bf16.gmra.mrb[0].mxu0 %v719
        %v807 = vpop.f32.mrb[0].mxu0
        %v808 = vadd.f32 %v695, %v807
        %v809 = vpop.f32.mrb[0].mxu0
        %v810 = vpop.f32.mrb[0].mxu0
        %v811 = vadd.f32 %v695, %v810
        %v812 = vpop.f32.mrb[0].mxu0
        %813 = vmatprep.mubr.bf16.mxu0 0
        %814 = vmatmul.mubr.bf16.gmra.mrb[0].mxu0 %v721
        %v815 = vpop.f32.mrb[0].mxu0
        %v816 = vadd.f32 %v695, %v815
        %v817 = vpop.f32.mrb[0].mxu0
        %v818 = vpop.f32.mrb[0].mxu0
        %v819 = vadd.f32 %v695, %v818
        %v820 = vpop.f32.mrb[0].mxu0
        %821 = vmatprep.mubr.bf16.mxu0 0
        %822 = vmatmul.mubr.bf16.gmra.mrb[0].mxu0 %v723
        %v823 = vpop.f32.mrb[0].mxu0
        %v824 = vadd.f32 %v695, %v823
        %v825 = vpop.f32.mrb[0].mxu0
        %v826 = vpop.f32.mrb[0].mxu0
        %v827 = vadd.f32 %v695, %v826
        %v828 = vpop.f32.mrb[0].mxu0
        %829 = vmatprep.mubr.bf16.mxu0 0
        %830 = vmatmul.mubr.bf16.gmra.mrb[0].mxu0 %v725
        %v831 = vpop.f32.mrb[0].mxu0
        %v832 = vadd.f32 %v695, %v831
        %v833 = vpop.f32.mrb[0].mxu0
        %v834 = vpop.f32.mrb[0].mxu0
        %v835 = vadd.f32 %v695, %v834
        %v836 = vpop.f32.mrb[0].mxu0
        %837 = vmatprep.mubr.bf16.mxu0 0
        %838 = vmatmul.mubr.bf16.gmra.mrb[0].mxu0 %v727
        %v839 = vpop.f32.mrb[0].mxu0
        %v840 = vadd.f32 %v695, %v839
        %v841 = vpop.f32.mrb[0].mxu0
        %v842 = vpop.f32.mrb[0].mxu0
        %v843 = vadd.f32 %v695, %v842
        %v844 = vpop.f32.mrb[0].mxu0
        %845 = vmatprep.mubr.bf16.mxu0 0
        %846 = vmatmul.mubr.bf16.gmra.mrb[0].mxu0 %v729
        %v847 = vpop.f32.mrb[0].mxu0
        %v848 = vadd.f32 %v695, %v847
        %v849 = vpop.f32.mrb[0].mxu0
        %v850 = vpop.f32.mrb[0].mxu0
        %v851 = vadd.f32 %v695, %v850
        %v852 = vpop.f32.mrb[0].mxu0
        %853 = vmatprep.mubr.bf16.mxu0 0
        %854 = vmatmul.mubr.bf16.gmra.mrb[0].mxu0 %v731
        %v855 = vpop.f32.mrb[0].mxu0
        %v856 = vadd.f32 %v695, %v855
        %v857 = vpop.f32.mrb[0].mxu0
        %v858 = vpop.f32.mrb[0].mxu0
        %v859 = vadd.f32 %v695, %v858
        %v860 = vpop.f32.mrb[0].mxu0
        %861 = vmatprep.mubr.bf16.mxu0 0
        %862 = vmatmul.mubr.bf16.gmra.mrb[0].mxu0 %v733
        %v863 = vpop.f32.mrb[0].mxu0
        %v864 = vadd.f32 %v695, %v863
        %v865 = vpop.f32.mrb[0].mxu0
        %v866 = vpop.f32.mrb[0].mxu0
        %v867 = vadd.f32 %v695, %v866
        %v868 = vpop.f32.mrb[0].mxu0
        %869 = vmatprep.mubr.bf16.mxu0 0
        %870 = vmatmul.mubr.bf16.gmra.mrb[0].mxu0 %v735
        %v871 = vpop.f32.mrb[0].mxu0
        %v872 = vadd.f32 %v695, %v871
        %v873 = vpop.f32.mrb[0].mxu0
        %v874 = vpop.f32.mrb[0].mxu0
        %v875 = vadd.f32 %v695, %v874
        %v876 = vpop.f32.mrb[0].mxu0
        %877 = vmatprep.mubr.bf16.mxu0 0
        %878 = vmatmul.mubr.bf16.gmra.mrb[0].mxu0 %v737
        %v879 = vpop.f32.mrb[0].mxu0
        %v880 = vadd.f32 %v695, %v879
        %v881 = vpop.f32.mrb[0].mxu0
        %v882 = vpop.f32.mrb[0].mxu0
        %v883 = vadd.f32 %v695, %v882
        %v884 = vpop.f32.mrb[0].mxu0
        %885 = vmatprep.mubr.bf16.mxu0 0
        %886 = vmatmul.mubr.bf16.gmra.mrb[0].mxu0 %v739
        %v887 = vpop.f32.mrb[0].mxu0
        %v888 = vadd.f32 %v695, %v887
        %v889 = vpop.f32.mrb[0].mxu0
        %v890 = vpop.f32.mrb[0].mxu0
        %v891 = vadd.f32 %v695, %v890
        %v892 = vpop.f32.mrb[0].mxu0
        %893 = vmatprep.mubr.bf16.mxu0 0
        %894 = vmatmul.mubr.bf16.gmra.mrb[0].mxu0 %v741
        %v895 = vpop.f32.mrb[0].mxu0
        %v896 = vadd.f32 %v695, %v895
        %v897 = vpop.f32.mrb[0].mxu0
        %v898 = vpop.f32.mrb[0].mxu0
        %v899 = vadd.f32 %v695, %v898
        %v900 = vpop.f32.mrb[0].mxu0
        %901 = vmatprep.mubr.bf16.mxu0 0
        %902 = vmatmul.mubr.bf16.gmra.mrb[0].mxu0 %v743
        %v903 = vpop.f32.mrb[0].mxu0
        %v904 = vadd.f32 %v695, %v903
        %v905 = vpop.f32.mrb[0].mxu0
        %v906 = vpop.f32.mrb[0].mxu0
        %v907 = vadd.f32 %v695, %v906
        %v908 = vpop.f32.mrb[0].mxu0
        %909 = vdwg.mxu0
        %v910 = vmax.f32 %v784, 0.0
        %v911 = vmax.f32 %v787, 0.0
        %v912 = vmax.f32 %v792, 0.0
        %v913 = vmax.f32 %v795, 0.0
        %v914 = vmax.f32 %v800, 0.0
        %v915 = vmax.f32 %v803, 0.0
        %v916 = vmax.f32 %v808, 0.0
        %v917 = vmax.f32 %v811, 0.0
        %v918 = vmax.f32 %v816, 0.0
        %v919 = vmax.f32 %v819, 0.0
        %v920 = vmax.f32 %v824, 0.0
        %v921 = vmax.f32 %v827, 0.0
        %v922 = vmax.f32 %v832, 0.0
        %v923 = vmax.f32 %v835, 0.0
        %v924 = vmax.f32 %v840, 0.0
        %v925 = vmax.f32 %v843, 0.0
        %v926 = vmax.f32 %v848, 0.0
        %v927 = vmax.f32 %v851, 0.0
        %v928 = vmax.f32 %v856, 0.0
        %v929 = vmax.f32 %v859, 0.0
        %v930 = vmax.f32 %v864, 0.0
        %v931 = vmax.f32 %v867, 0.0
        %v932 = vmax.f32 %v872, 0.0
        %v933 = vmax.f32 %v875, 0.0
        %v934 = vmax.f32 %v880, 0.0
        %v935 = vmax.f32 %v883, 0.0
        %v936 = vmax.f32 %v888, 0.0
        %v937 = vmax.f32 %v891, 0.0
        %v938 = vmax.f32 %v896, 0.0
        %v939 = vmax.f32 %v899, 0.0
        %v940 = vmax.f32 %v904, 0.0
        %v941 = vmax.f32 %v907, 0.0
        %942 = vst [vmem:[%s177] sm:$0xff] %v910
        %943 = vst [vmem:[%s177 + $0x8] sm:$0xff] %v911
        %944 = vst [vmem:[%s177 + $0x10] sm:$0xff] %v912
        %945 = vst [vmem:[%s177 + $0x18] sm:$0xff] %v913
        %946 = vst [vmem:[%s177 + $0x20] sm:$0xff] %v914
        %947 = vst [vmem:[%s177 + $0x28] sm:$0xff] %v915
        %948 = vst [vmem:[%s177 + $0x30] sm:$0xff] %v916
        %949 = vst [vmem:[%s177 + $0x38] sm:$0xff] %v917
        %950 = vst [vmem:[%s177 + $0x40] sm:$0xff] %v918
        %951 = vst [vmem:[%s177 + $0x48] sm:$0xff] %v919
        %952 = vst [vmem:[%s177 + $0x50] sm:$0xff] %v920
        %953 = vst [vmem:[%s177 + $0x58] sm:$0xff] %v921
        %954 = vst [vmem:[%s177 + $0x60] sm:$0xff] %v922
        %955 = vst [vmem:[%s177 + $0x68] sm:$0xff] %v923
        %956 = vst [vmem:[%s177 + $0x70] sm:$0xff] %v924
        %957 = vst [vmem:[%s177 + $0x78] sm:$0xff] %v925
        %958 = vst [vmem:[%s177 + $0x80] sm:$0xff] %v926
        %959 = vst [vmem:[%s177 + $0x88] sm:$0xff] %v927
        %960 = vst [vmem:[%s177 + $0x90] sm:$0xff] %v928
        %961 = vst [vmem:[%s177 + $0x98] sm:$0xff] %v929
        %962 = vst [vmem:[%s177 + $0xa0] sm:$0xff] %v930
        %963 = vst [vmem:[%s177 + $0xa8] sm:$0xff] %v931
        %964 = vst [vmem:[%s177 + $0xb0] sm:$0xff] %v932
        %965 = vst [vmem:[%s177 + $0xb8] sm:$0xff] %v933
        %966 = vst [vmem:[%s177 + $0xc0] sm:$0xff] %v934
        %967 = vst [vmem:[%s177 + $0xc8] sm:$0xff] %v935
        %968 = vst [vmem:[%s177 + $0xd0] sm:$0xff] %v936
        %969 = vst [vmem:[%s177 + $0xd8] sm:$0xff] %v937
        %970 = vst [vmem:[%s177 + $0xe0] sm:$0xff] %v938
        %971 = vst [vmem:[%s177 + $0xe8] sm:$0xff] %v939
        %972 = vst [vmem:[%s177 + $0xf0] sm:$0xff] %v940
        %973 = vst [vmem:[%s177 + $0xf8] sm:$0xff] %v941
        %s974 = sand.u32 %s107, 1
        %s975 = scalar_lea.sflag [#allocation3], %s974
        %s976 = sand.u32 %s107, 1
        %s977 = smul.addr %s976, 256
        %s978 = scalar_lea.vmem [#allocation2], %s977
        // Predicated region
        $region33: #{tpu_custom_call.1} parent=31 // pred_check
          %p979 = pneg %p117
        $region34: #{tpu_custom_call.1} parent=31 // pred_check_branch
          %981 = sbr.rel (%p979) target = $region36
        $region35: #{tpu_custom_call.1} parent=31 // pred_region
          %s982 = smul.u32 32, %s22
          %s984 = ssub.s32 4096, 4096
          %985 = vsyncadd %s975, %s984
          %s986 = smul.addr %s21, 64
          %s987 = sadd.s32 %s982, %s986
          %s988 = smul.addr %s987, 128
          %s989 = scalar_lea.hbm %s3, %s988
          %s990 = sshll.u32 %s978, 4
          %s991 = int_to_ptr.vmem [resolvable:$true] %s990
          %996 = dma.vmem_to_hbm [thread:$0]  %s991, 4096, %s989, %s975, 128, 128, 8
        $region36: #{tpu_custom_call.1} parent=31 // pred_fallthru
          _
      $region32: #{tpu_custom_call.1} parent=5 // pred_fallthru
        _
      %p997 = scmp.le.s32.totalorder 2, %s12
      // Predicated region
      $region37: #{tpu_custom_call.1} parent=5 // pred_check
        %p998 = pneg %p997
      $region38: #{tpu_custom_call.1} parent=5 // pred_check_branch
        %1000 = sbr.rel (%p998) target = $region40
      $region39: #{tpu_custom_call.1} parent=5 // pred_region
        %s1001 = ssub.s32 %s12, 2
        // Predicated region
        $region41: #{tpu_custom_call.1} parent=39 // pred_check
          %p1002 = pneg %p123
        $region42: #{tpu_custom_call.1} parent=39 // pred_check_branch
          %1004 = sbr.rel (%p1002) target = $region44
        $region43: #{tpu_custom_call.1} parent=39 // pred_region
          %s1005 = sand.u32 %s108, 1
          %s1006 = scalar_lea.sflag [#allocation3], %s1005
          %s1007 = sand.u32 %s108, 1
          %s1008 = smul.addr %s1007, 256
          %s1009 = scalar_lea.vmem [#allocation2], %s1008
          %1010 = dma.done %s1006, 4096
        $region44: #{tpu_custom_call.1} parent=39 // pred_fallthru
          _
      $region40: #{tpu_custom_call.1} parent=5 // pred_fallthru
        _
    $region6: #{tpu_custom_call.1} parent=1 // loop_footer
      %s16 = sadd.s32 1, %s12
    $region7: #{tpu_custom_call.1} parent=1 // loop_footer_branch
      %11 = sbr.rel target = $region3
    $region8: #{tpu_custom_call.1} parent=1 // loop_exit
      _
    %1011 = vsyncpa [#allocation3], 1
    %s1012 = scalar_lea.sflag [#allocation3], 1
    %1013 = vsyncpa %s1012, 1

</llo_original>
